<compile_context>
chip_gen: v5e
topology: v5e:2x2
jax: 0.10.0
libtpu: 0.0.40
codegen_flags: <defaults>
</compile_context>

<pallas_src>
import functools

import jax
import jax.numpy as jnp
from jax.experimental import pallas as pl
from jax.experimental.pallas import tpu as pltpu


def _round_up(x, m):
    return ((x + m - 1) // m) * m


def _round_down(x, m):
    return max((x // m) * m, m)


@functools.lru_cache(maxsize=1)
def _chip_config():
    """Per-generation tuning knobs (robust fallbacks if queries fail)."""
    vmem_bytes = 64 * 1024 * 1024
    try:
        vmem_bytes = int(getattr(pltpu.get_tpu_info(), "vmem_capacity_bytes"))
    except Exception:
        pass
    gen = 6
    try:
        kind = jax.devices()[0].device_kind.lower()
        if ("v2" in kind) or ("v3" in kind) or ("v4" in kind) or ("v5" in kind):
            gen = 5
        elif "v6" in kind:
            gen = 6
        elif "7" in kind:
            gen = 7
    except Exception:
        pass

    if gen >= 7:
        block_bytes = 6 * 1024 * 1024   # ~1.9 us of DMA at 3.2 TB/s, hides step overhead
        min_steps = 4                   # >=2 grid steps per TensorCore (2 TCs)
        max_packed_c = 8                # butterfly is XLU-bound beyond tiny C on 2-XLU chips
    elif gen == 6:
        block_bytes = 4 * 1024 * 1024
        min_steps = 1                   # single TC: no forced splitting
        max_packed_c = 16
    else:  # v5e-class: ~820 GB/s HBM, 3 XLU ports -> packing stays memory-bound for all C
        block_bytes = 4 * 1024 * 1024
        min_steps = 1
        max_packed_c = 64

    return dict(
        generation=gen,
        block_bytes=block_bytes,
        min_steps=min_steps,
        max_packed_c=max_packed_c,
        vmem_limit=int(vmem_bytes * 3 // 4),
    )


def _pick_row_tile(rows, row_bytes, itemsize, block_bytes, min_steps):
    """Largest dtype-aligned row tile with ~block_bytes per input block."""
    sub = max(8, 32 // max(itemsize, 1))                 # 8 f32 / 16 bf16 / 32 int8
    tm = _round_down(max(block_bytes // max(row_bytes, 1), sub), sub)
    if min_steps > 1 and rows > sub:
        tm = min(tm, _round_up(pl.cdiv(rows, min_steps), sub))
    tm = min(tm, _round_up(rows, sub))                   # at most one (ragged) block
    return max(tm, sub)


# ---------------------------------------------------------------------------
# channels_last, generic path: block (tm, C), reduce over the lane (C) axis.
# ---------------------------------------------------------------------------
def _ln_lanes_kernel(x_ref, w_ref, b_ref, o_ref, *, eps, lowp_affine):
    x = x_ref[...].astype(jnp.float32)
    mean = jnp.mean(x, axis=-1, keepdims=True)
    xc = x - mean
    var = jnp.mean(xc * xc, axis=-1, keepdims=True)      # centered: robust to large means
    inv = jax.lax.rsqrt(var + eps)
    if lowp_affine:
        ot = o_ref.dtype
        o_ref[...] = (xc.astype(ot) * inv.astype(ot)) * w_ref[...].astype(ot) \
                     + b_ref[...].astype(ot)
    else:
        y = xc * inv * w_ref[...].astype(jnp.float32) + b_ref[...].astype(jnp.float32)
        o_ref[...] = y.astype(o_ref.dtype)


# ---------------------------------------------------------------------------
# channels_last, packed path for small C (128 % C == 0): k = 128 // C rows are
# packed along the 128-lane axis; per-row reductions become aligned, segment-
# local lane reductions via an exact XOR-butterfly (roll on XLU + select).
# Butterfly masks are precomputed once (one (1,128) vreg each) and reused for
# both the mean and the variance passes.
# ---------------------------------------------------------------------------
def _segment_sum_lanes(x, masks):
    """Every lane ends up with the f32 sum of its aligned segment."""
    p = x.shape[-1]
    s = 1
    for m in masks:
        up = pltpu.roll(x, shift=p - s, axis=1)          # out[j] = x[j + s]
        down = pltpu.roll(x, shift=s, axis=1)            # out[j] = x[j - s]
        x = x + jnp.where(m, up, down)
        s *= 2
    return x


def _ln_packed_kernel(x_ref, w_ref, b_ref, o_ref, *, eps, c, lowp_affine):
    x = x_ref[...].astype(jnp.float32)                   # (tm, 128), lane-dense
    p = x.shape[-1]
    lane = jax.lax.broadcasted_iota(jnp.int32, (1, p), 1)
    masks = []
    s = 1
    while s < c:
        masks.append((lane & s) == 0)                    # hoisted, reused by both passes
        s *= 2
    inv_c = 1.0 / c
    mean = _segment_sum_lanes(x, masks) * inv_c
    xc = x - mean
    var = _segment_sum_lanes(xc * xc, masks) * inv_c
    inv = jax.lax.rsqrt(var + eps)
    if lowp_affine:
        ot = o_ref.dtype
        o_ref[...] = (xc.astype(ot) * inv.astype(ot)) * w_ref[...].astype(ot) \
                     + b_ref[...].astype(ot)
    else:
        y = xc * inv * w_ref[...].astype(jnp.float32) + b_ref[...].astype(jnp.float32)
        o_ref[...] = y.astype(o_ref.dtype)


def _layernorm_lanes(x2d, weight, bias, eps):
    """LayerNorm over the last axis of a (rows, C) array via Pallas."""
    rows, c = x2d.shape
    dtype = x2d.dtype
    itemsize = jnp.dtype(dtype).itemsize
    cfg = _chip_config()
    lowp_affine = (dtype == jnp.bfloat16) and (cfg["generation"] >= 6)

    packable = (c < 128) and (128 % c == 0) and (c <= cfg["max_packed_c"])
    k = 128 // c if packable else 1
    packed = k > 1 and rows % k == 0

    if packed:
        p = k * c                                        # == 128 lanes, fully dense
        xp = x2d.reshape(rows // k, p)                   # free row-major reshape
        w_in = jnp.tile(weight.reshape(-1), k).reshape(1, p)
        b_in = jnp.tile(bias.reshape(-1), k).reshape(1, p)
        kernel = functools.partial(_ln_packed_kernel, eps=eps, c=c,
                                   lowp_affine=lowp_affine)
        n_trans = rows * c                               # rsqrt broadcast over 128 lanes
    else:
        p = c
        xp = x2d
        w_in = weight.reshape(1, c)
        b_in = bias.reshape(1, c)
        kernel = functools.partial(_ln_lanes_kernel, eps=eps, lowp_affine=lowp_affine)
        n_trans = rows

    prows = xp.shape[0]
    tm = _pick_row_tile(prows, p * itemsize, itemsize,
                        cfg["block_bytes"], cfg["min_steps"])
    grid = (pl.cdiv(prows, tm),)                         # ragged last block is fine

    cost = pl.CostEstimate(
        flops=int(10 * rows * c),
        transcendentals=int(n_trans),
        bytes_accessed=int(2 * rows * c * itemsize + 2 * c * 4),
    )

    out = pl.pallas_call(
        kernel,
        out_shape=jax.ShapeDtypeStruct(xp.shape, dtype),
        grid_spec=pltpu.PrefetchScalarGridSpec(
            num_scalar_prefetch=0,
            grid=grid,
            in_specs=[
                pl.BlockSpec((tm, p), lambda i: (i, 0)),
                pl.BlockSpec((1, p), lambda i: (0, 0)),
                pl.BlockSpec((1, p), lambda i: (0, 0)),
            ],
            out_specs=pl.BlockSpec((tm, p), lambda i: (i, 0)),
        ),
        compiler_params=pltpu.CompilerParams(
            dimension_semantics=("parallel",),
            vmem_limit_bytes=cfg["vmem_limit"],
        ),
        cost_estimate=cost,
    )(xp, w_in, b_in)

    if packed:
        out = out.reshape(rows, c)
    return out


# ---------------------------------------------------------------------------
# channels_first (NCHW) path: no transposes.  View x as (N, C, H*W); block is
# (1, C, TN), reduction over the sublane (C) axis, output lane-dense.
# ---------------------------------------------------------------------------
def _ln_channels_first_kernel(x_ref, w_ref, b_ref, o_ref, *, eps, lowp_affine):
    x = x_ref[...].astype(jnp.float32)                   # (1, C, TN)
    mean = jnp.mean(x, axis=1, keepdims=True)
    xc = x - mean
    var = jnp.mean(xc * xc, axis=1, keepdims=True)
    inv = jax.lax.rsqrt(var + eps)
    # (1, C, 1) weight/bias are re-broadcast across TN lanes each step; cost is
    # a few hundred cycles and hidden under DMA -- accepted per review.
    if lowp_affine:
        ot = o_ref.dtype
        o_ref[...] = (xc.astype(ot) * inv.astype(ot)) * w_ref[...].astype(ot) \
                     + b_ref[...].astype(ot)
    else:
        y = xc * inv * w_ref[...].astype(jnp.float32) + b_ref[...].astype(jnp.float32)
        o_ref[...] = y.astype(o_ref.dtype)


def _layernorm_channels_first(x, weight, bias, eps):
    n, c = x.shape[0], x.shape[1]
    hw = 1
    for d in x.shape[2:]:
        hw *= d
    x3 = x.reshape(n, c, hw)                             # free reshape, stays NCHW order
    dtype = x.dtype
    itemsize = jnp.dtype(dtype).itemsize
    cfg = _chip_config()
    lowp_affine = (dtype == jnp.bfloat16) and (cfg["generation"] >= 6)

    if hw <= 128:
        # TODO(synk): hw < 128 keeps lane-sparse (masked) stores; a one-time
        # relayout to channels_last when C >= 128 would be lane-dense but costs
        # an extra HBM pass -- accepted hit for the late small-HW stages.
        tn = hw
    else:
        tn = max((cfg["block_bytes"] // (c * itemsize)) // 128 * 128, 128)
        tn = min(tn, _round_up(hw, 128))
        if cfg["min_steps"] > 1 and n * pl.cdiv(hw, tn) < cfg["min_steps"]:
            needed_j = max(pl.cdiv(cfg["min_steps"], n), 1)
            tn = min(tn, max(_round_up(pl.cdiv(hw, needed_j), 128), 128))
    grid = (n, pl.cdiv(hw, tn))

    w_in = weight.reshape(1, c, 1)
    b_in = bias.reshape(1, c, 1)

    cost = pl.CostEstimate(
        flops=int(10 * n * c * hw),
        transcendentals=int(n * hw),
        bytes_accessed=int(2 * n * c * hw * itemsize + 2 * c * 4),
    )

    out = pl.pallas_call(
        functools.partial(_ln_channels_first_kernel, eps=eps, lowp_affine=lowp_affine),
        out_shape=jax.ShapeDtypeStruct((n, c, hw), dtype),
        grid_spec=pltpu.PrefetchScalarGridSpec(
            num_scalar_prefetch=0,
            grid=grid,
            in_specs=[
                pl.BlockSpec((1, c, tn), lambda i, j: (i, 0, j)),
                pl.BlockSpec((1, c, 1), lambda i, j: (0, 0, 0)),
                pl.BlockSpec((1, c, 1), lambda i, j: (0, 0, 0)),
            ],
            out_specs=pl.BlockSpec((1, c, tn), lambda i, j: (i, 0, j)),
        ),
        compiler_params=pltpu.CompilerParams(
            dimension_semantics=("parallel", "parallel"),
            vmem_limit_bytes=cfg["vmem_limit"],
        ),
        cost_estimate=cost,
    )(x3, w_in, b_in)

    return out.reshape(x.shape)


# ---------------------------------------------------------------------------
# Public forward (matches the PyTorch module semantics).
# ---------------------------------------------------------------------------
def layer_norm(x, weight, bias, eps=1e-6, data_format="channels_last"):
    if data_format not in ("channels_last", "channels_first"):
        raise NotImplementedError
    if data_format == "channels_last":
        c = x.shape[-1]
        lead = x.shape[:-1]
        y2d = _layernorm_lanes(x.reshape(-1, c), weight, bias, eps)
        return y2d.reshape(*lead, c)
    return _layernorm_channels_first(x, weight, bias, eps)


def _reference_layer_norm(x, weight, bias, eps, data_format):
    """Pure-JAX reference mirroring the PyTorch forward (f32 math)."""
    xf = x.astype(jnp.float32)
    wf = weight.astype(jnp.float32)
    bf = bias.astype(jnp.float32)
    if data_format == "channels_last":
        u = jnp.mean(xf, axis=-1, keepdims=True)
        s = jnp.mean((xf - u) ** 2, axis=-1, keepdims=True)
        return wf * (xf - u) / jnp.sqrt(s + eps) + bf
    u = jnp.mean(xf, axis=1, keepdims=True)
    s = jnp.mean((xf - u) ** 2, axis=1, keepdims=True)
    xn = (xf - u) / jnp.sqrt(s + eps)
    bshape = (1, x.shape[1]) + (1,) * (x.ndim - 2)
    return wf.reshape(bshape) * xn + bf.reshape(bshape)


if __name__ == "__main__":
    eps = 1e-6
    key = jax.random.PRNGKey(0)
    k1, k2, k3, k4, k5, k6 = jax.random.split(key, 6)

    ln_cf = jax.jit(functools.partial(layer_norm, eps=eps, data_format="channels_first"))
    ln_cl = jax.jit(functools.partial(layer_norm, eps=eps, data_format="channels_last"))

    # --- channels_first (NCHW), C = 4: sublane-reduction kernel, no transposes.
    x_cf = jax.random.normal(k1, (2, 4, 16, 16), dtype=jnp.float32)
    w_cf = 1.0 + 0.1 * jax.random.normal(k2, (4,), dtype=jnp.float32)
    b_cf = 0.1 * jax.random.normal(k3, (4,), dtype=jnp.float32)
    y_cf = jax.block_until_ready(ln_cf(x_cf, w_cf, b_cf))
    r_cf = _reference_layer_norm(x_cf, w_cf, b_cf, eps, "channels_first")
    assert y_cf.shape == x_cf.shape
    assert jnp.max(jnp.abs(y_cf - r_cf)) < 1e-4

    # --- channels_last, C = 8: packed (lane-dense butterfly) path on all chips.
    x_p = jax.random.normal(k4, (2, 8, 8, 8), dtype=jnp.float32)
    w_p = 1.0 + 0.1 * jax.random.normal(k5, (8,), dtype=jnp.float32)
    b_p = 0.1 * jax.random.normal(k6, (8,), dtype=jnp.float32)
    y_p = jax.block_until_ready(ln_cl(x_p, w_p, b_p))
    r_p = _reference_layer_norm(x_p, w_p, b_p, eps, "channels_last")
    assert y_p.shape == x_p.shape
    assert jnp.max(jnp.abs(y_p - r_p)) < 1e-4

    # --- channels_last, C = 32: packed or generic depending on the chip threshold.
    x_cl = jax.random.normal(k4, (2, 8, 8, 32), dtype=jnp.float32)
    w_cl = 1.0 + 0.1 * jax.random.normal(k5, (32,), dtype=jnp.float32)
    b_cl = 0.1 * jax.random.normal(k6, (32,), dtype=jnp.float32)
    y_cl = jax.block_until_ready(ln_cl(x_cl, w_cl, b_cl))
    r_cl = _reference_layer_norm(x_cl, w_cl, b_cl, eps, "channels_last")
    assert y_cl.shape == x_cl.shape
    assert jnp.max(jnp.abs(y_cl - r_cl)) < 1e-4

    # --- channels_last, C = 160, ragged row count: generic path + ragged grid.
    x_g = jax.random.normal(k2, (2, 5, 7, 160), dtype=jnp.float32)
    w_g = 1.0 + 0.1 * jax.random.normal(k3, (160,), dtype=jnp.float32)
    b_g = 0.1 * jax.random.normal(k5, (160,), dtype=jnp.float32)
    y_g = jax.block_until_ready(ln_cl(x_g, w_g, b_g))
    r_g = _reference_layer_norm(x_g, w_g, b_g, eps, "channels_last")
    assert y_g.shape == x_g.shape
    assert jnp.max(jnp.abs(y_g - r_g)) < 1e-4

    # --- channels_last bf16, C = 256: exercises the low-precision affine tail
    # (v6e/v7x) with dtype-aware sublane tiling; f32 path on v5e.
    x_b = jax.random.normal(k1, (4, 16, 256), dtype=jnp.bfloat16)
    w_b = 1.0 + 0.1 * jax.random.normal(k2, (256,), dtype=jnp.float32)
    b_b = 0.1 * jax.random.normal(k3, (256,), dtype=jnp.float32)
    y_b = jax.block_until_ready(ln_cl(x_b, w_b, b_b))
    r_b = _reference_layer_norm(x_b, w_b, b_b, eps, "channels_last")
    assert y_b.shape == x_b.shape
    assert y_b.dtype == jnp.bfloat16
    assert jnp.max(jnp.abs(y_b.astype(jnp.float32) - r_b)) < 0.15

    print("KERNEL_OK")
</pallas_src>

<mosaic_0001>
module attributes {stable_mosaic.version = 11 : i64} {
  func.func @_ln_channels_first_kernel(%arg0: i32, %arg1: i32, %arg2: memref<1x4x256xf32, #tpu.memory_space<vmem>>, %arg3: memref<1x4x1xf32, #tpu.memory_space<vmem>>, %arg4: memref<1x4x1xf32, #tpu.memory_space<vmem>>, %arg5: memref<1x4x256xf32, #tpu.memory_space<vmem>>) attributes {dimension_semantics = [#tpu.dimension_semantics<parallel>, #tpu.dimension_semantics<parallel>], iteration_bounds = array<i64: 2, 1>, scalar_prefetch = 0 : i64, scratch_operands = 0 : i64, tpu.core_type = #tpu.core_type<tc>, window_params = [{transform_indices = @transform_0, window_bounds = array<i64: 1, 4, 256>}, {pipeline_mode = #tpu.pipeline_mode<synchronous>, transform_indices = @transform_1, window_bounds = array<i64: 1, 4, 1>}, {pipeline_mode = #tpu.pipeline_mode<synchronous>, transform_indices = @transform_2, window_bounds = array<i64: 1, 4, 1>}, {transform_indices = @transform_3, window_bounds = array<i64: 1, 4, 256>}]} {
    %c0 = arith.constant 0 : index
    %c0_0 = arith.constant 0 : index
    %c0_1 = arith.constant 0 : index
    %0 = vector.load %arg2[%c0, %c0_0, %c0_1] : memref<1x4x256xf32, #tpu.memory_space<vmem>>, vector<1x4x256xf32>
    %cst = arith.constant dense<0.000000e+00> : vector<1x256xf32>
    %1 = vector.multi_reduction <add>, %0, %cst [1] : vector<1x4x256xf32> to vector<1x256xf32>
    %2 = vector.shape_cast %1 : vector<1x256xf32> to vector<1x1x256xf32>
    %cst_2 = arith.constant 4.000000e+00 : f32
    %3 = vector.broadcast %cst_2 : f32 to vector<1x1x256xf32>
    %4 = arith.divf %2, %3 : vector<1x1x256xf32>
    %5 = vector.broadcast %4 : vector<1x1x256xf32> to vector<1x4x256xf32>
    %6 = arith.subf %0, %5 : vector<1x4x256xf32>
    %7 = arith.mulf %6, %6 : vector<1x4x256xf32>
    %cst_3 = arith.constant dense<0.000000e+00> : vector<1x256xf32>
    %8 = vector.multi_reduction <add>, %7, %cst_3 [1] : vector<1x4x256xf32> to vector<1x256xf32>
    %9 = vector.shape_cast %8 : vector<1x256xf32> to vector<1x1x256xf32>
    %cst_4 = arith.constant 4.000000e+00 : f32
    %10 = vector.broadcast %cst_4 : f32 to vector<1x1x256xf32>
    %11 = arith.divf %9, %10 : vector<1x1x256xf32>
    %cst_5 = arith.constant 9.99999997E-7 : f32
    %12 = vector.broadcast %cst_5 : f32 to vector<1x1x256xf32>
    %13 = arith.addf %11, %12 : vector<1x1x256xf32>
    %14 = math.rsqrt %13 : vector<1x1x256xf32>
    %15 = vector.broadcast %14 : vector<1x1x256xf32> to vector<1x4x256xf32>
    %16 = arith.mulf %6, %15 : vector<1x4x256xf32>
    %c0_6 = arith.constant 0 : index
    %c0_7 = arith.constant 0 : index
    %c0_8 = arith.constant 0 : index
    %17 = vector.load %arg3[%c0_6, %c0_7, %c0_8] : memref<1x4x1xf32, #tpu.memory_space<vmem>>, vector<1x4x1xf32>
    %18 = vector.broadcast %17 : vector<1x4x1xf32> to vector<1x4x256xf32>
    %19 = arith.mulf %16, %18 : vector<1x4x256xf32>
    %c0_9 = arith.constant 0 : index
    %c0_10 = arith.constant 0 : index
    %c0_11 = arith.constant 0 : index
    %20 = vector.load %arg4[%c0_9, %c0_10, %c0_11] : memref<1x4x1xf32, #tpu.memory_space<vmem>>, vector<1x4x1xf32>
    %21 = vector.broadcast %20 : vector<1x4x1xf32> to vector<1x4x256xf32>
    %22 = arith.addf %19, %21 : vector<1x4x256xf32>
    %c0_12 = arith.constant 0 : index
    %c0_13 = arith.constant 0 : index
    %c0_14 = arith.constant 0 : index
    %23 = vector.load %arg5[%c0_12, %c0_13, %c0_14] : memref<1x4x256xf32, #tpu.memory_space<vmem>>, vector<1x4x256xf32>
    tpu.vector_store %arg5[%c0_12, %c0_13, %c0_14], %22 {strides = array<i32>} : memref<1x4x256xf32, #tpu.memory_space<vmem>>, vector<1x4x256xf32>,
    return
  }
  func.func @transform_0(%arg0: i32, %arg1: i32) -> (i32, i32, i32) {
    %c0_i32 = arith.constant 0 : i32
    %c0_i32_0 = arith.constant 0 : i32
    return %arg0, %c0_i32, %arg1 : i32, i32, i32
  }
  func.func @transform_1(%arg0: i32, %arg1: i32) -> (i32, i32, i32) {
    %c0_i32 = arith.constant 0 : i32
    %c0_i32_0 = arith.constant 0 : i32
    %c0_i32_1 = arith.constant 0 : i32
    %c0_i32_2 = arith.constant 0 : i32
    return %c0_i32, %c0_i32_0, %c0_i32_1 : i32, i32, i32
  }
  func.func @transform_2(%arg0: i32, %arg1: i32) -> (i32, i32, i32) {
    %c0_i32 = arith.constant 0 : i32
    %c0_i32_0 = arith.constant 0 : i32
    %c0_i32_1 = arith.constant 0 : i32
    %c0_i32_2 = arith.constant 0 : i32
    return %c0_i32, %c0_i32_0, %c0_i32_1 : i32, i32, i32
  }
  func.func @transform_3(%arg0: i32, %arg1: i32) -> (i32, i32, i32) {
    %c0_i32 = arith.constant 0 : i32
    %c0_i32_0 = arith.constant 0 : i32
    return %arg0, %c0_i32, %arg1 : i32, i32, i32
  }
}

</mosaic_0001>

<llo_original>
// kernel: layer_norm.1
$region0: #{layer_norm.1}
  #allocation0 [shape = 'u32[]', space=smem, size = 0x4, offset = 0x4, fixed_abs, tag = 'smem constant byte address 0x4 - core index']
  #allocation1 [shape = 'u32[72,128]{1,0:T(1,128)}', space=vmem, size = 0x9000, scoped, tag = 'internal scratch']
  %s0 = inlined_call_operand.vmem [shape: f32[2,4,256], index: 0, kind: input, shape index: {}]
  %s1 = inlined_call_operand.vmem [shape: f32[1,4,1], index: 1, kind: input, shape index: {}]
  %s2 = inlined_call_operand.vmem [shape: f32[1,4,1], index: 2, kind: input, shape index: {}]
  %s3 = inlined_call_operand.vmem [shape: f32[2,4,256], index: 3, kind: output, shape index: {}]
  %s4 = sld [smem:[#allocation0]]
  $region45: #{layer_norm.1} parent=0
    _
  %s6 = ssub.s32 1, %s4
  %s7 = scalar_select 0, %s6, %s4
  loop: start=0, step=1, limit=4
  $region2: #{layer_norm.1} parent=0 // loop_pre_header
    _
  $region3: #{layer_norm.1} parent=0 // loop_header
    %s9 = sphi 0, %s13
    %p10 = scmp.ge.s32.totalorder %s9, 4
    %s16 = sphi 0, %s28
    %s17 = sphi 0, %s24
    %s18 = sphi 0, %s16
    %s19 = sphi 0, %s17
    %s20 = sphi 0, %s18
    %s21 = sphi 0, %s19
    %s33 = sphi 0, %s35
    %s36 = sphi 0, %s33
    %s37 = sphi 0, %s36
    %s53 = sphi 0, %s37
    %s57 = sphi 0, %s57
    %s59 = sphi 0, %s57
    %s60 = sphi 0, %s59
    %s74 = sphi 0, %s60
    %s78 = sphi 0, %s78
    %s80 = sphi 0, %s78
    %s81 = sphi 0, %s80
    %s95 = sphi 0, %s81
    %s103 = sphi 0, %s105
    %s106 = sphi 0, %s103
    %s107 = sphi 0, %s106
    %s123 = sphi 0, %s107
  $region4: #{layer_norm.1} parent=0 // loop_header_branch
    %12 = sbr.rel (%p10) target = $region8
  $region5: #{layer_norm.1} parent=0 // loop_body
    %s14 = ssub.s32 %s9, 1
    %s15 = ssub.s32 %s9, 2
    %s22 = sadd.s32 1, %s17
    %p23 = scmp.ge.s32.totalorder %s22, 1
    %s24 = scalar_select %p23, 0, %s22
    %s25 = sadd.s32 1, %s16
    %s26 = scalar_select %p23, %s25, %s16
    %p27 = scmp.ge.s32.totalorder %s26, 2
    %s28 = scalar_select %p27, 0, %s26
    %s29 = ssub.s32 %s16, %s28
    %s30 = ssub.s32 %s17, %s24
    %s31 = sor.u32 %s29, %s30
    %p32 = scmp.eq.s32.totalorder %s31, 0
    %s34 = sadd.s32 %s33, 1
    %s35 = scalar_select %p32, %s33, %s34
    %p38 = pneg %p32
    %p39 = scmp.eq.s32.totalorder %s9, 1
    %p40 = por %p38, %p39
    %p41 = scmp.ne.s32.totalorder %s33, %s36
    %p42 = scmp.eq.s32.totalorder %s9, 0
    %p43 = por %p41, %p42
    %p44 = scmp.ne.s32.totalorder %s33, %s36
    %p45 = scmp.eq.s32.totalorder %s14, 1
    %p46 = por %p44, %p45
    %p47 = scmp.ne.s32.totalorder %s36, %s37
    %p48 = scmp.eq.s32.totalorder %s14, 0
    %p49 = por %p47, %p48
    %p50 = scmp.ne.s32.totalorder %s36, %s37
    %p51 = scmp.eq.s32.totalorder %s15, 1
    %p52 = por %p50, %p51
    %p54 = scmp.ne.s32.totalorder %s37, %s53
    %p55 = scmp.eq.s32.totalorder %s15, 0
    %p56 = por %p54, %p55
    %s58 = sadd.s32 %s57, 1
    %p61 = scmp.eq.s32.totalorder %s9, 1
    %p62 = scmp.ne.s32.totalorder %s57, %s59
    %p63 = scmp.eq.s32.totalorder %s9, 0
    %p64 = por %p62, %p63
    %p65 = scmp.ne.s32.totalorder %s57, %s59
    %p66 = scmp.eq.s32.totalorder %s14, 1
    %p67 = por %p65, %p66
    %p68 = scmp.ne.s32.totalorder %s59, %s60
    %p69 = scmp.eq.s32.totalorder %s14, 0
    %p70 = por %p68, %p69
    %p71 = scmp.ne.s32.totalorder %s59, %s60
    %p72 = scmp.eq.s32.totalorder %s15, 1
    %p73 = por %p71, %p72
    %p75 = scmp.ne.s32.totalorder %s60, %s74
    %p76 = scmp.eq.s32.totalorder %s15, 0
    %p77 = por %p75, %p76
    %s79 = sadd.s32 %s78, 1
    %p82 = scmp.eq.s32.totalorder %s9, 1
    %p83 = scmp.ne.s32.totalorder %s78, %s80
    %p84 = scmp.eq.s32.totalorder %s9, 0
    %p85 = por %p83, %p84
    %p86 = scmp.ne.s32.totalorder %s78, %s80
    %p87 = scmp.eq.s32.totalorder %s14, 1
    %p88 = por %p86, %p87
    %p89 = scmp.ne.s32.totalorder %s80, %s81
    %p90 = scmp.eq.s32.totalorder %s14, 0
    %p91 = por %p89, %p90
    %p92 = scmp.ne.s32.totalorder %s80, %s81
    %p93 = scmp.eq.s32.totalorder %s15, 1
    %p94 = por %p92, %p93
    %p96 = scmp.ne.s32.totalorder %s81, %s95
    %p97 = scmp.eq.s32.totalorder %s15, 0
    %p98 = por %p96, %p97
    %s99 = ssub.s32 %s16, %s28
    %s100 = ssub.s32 %s17, %s24
    %s101 = sor.u32 %s99, %s100
    %p102 = scmp.eq.s32.totalorder %s101, 0
    %s104 = sadd.s32 %s103, 1
    %s105 = scalar_select %p102, %s103, %s104
    %p108 = pneg %p102
    %p109 = scmp.eq.s32.totalorder %s9, 1
    %p110 = por %p108, %p109
    %p111 = scmp.ne.s32.totalorder %s103, %s106
    %p112 = scmp.eq.s32.totalorder %s9, 0
    %p113 = por %p111, %p112
    %p114 = scmp.ne.s32.totalorder %s103, %s106
    %p115 = scmp.eq.s32.totalorder %s14, 1
    %p116 = por %p114, %p115
    %p117 = scmp.ne.s32.totalorder %s106, %s107
    %p118 = scmp.eq.s32.totalorder %s14, 0
    %p119 = por %p117, %p118
    %p120 = scmp.ne.s32.totalorder %s106, %s107
    %p121 = scmp.eq.s32.totalorder %s15, 1
    %p122 = por %p120, %p121
    %p124 = scmp.ne.s32.totalorder %s107, %s123
    %p125 = scmp.eq.s32.totalorder %s15, 0
    %p126 = por %p124, %p125
    %p127 = scmp.le.s32.totalorder 1, %s9
    %p128 = scmp.lt.s32.totalorder %s9, 3
    %p129 = pnand %p127, %p128
    %p130 = pneg %p129
    // Predicated region
    $region9: #{layer_norm.1} parent=5 // pred_check
      _
    $region10: #{layer_norm.1} parent=5 // pred_check_branch
      %132 = sbr.rel (%p129) target = $region12
    $region11: #{layer_norm.1} parent=5 // pred_region
      %s133 = ssub.s32 %s9, 1
      // Predicated region
      $region13: #{layer_norm.1} parent=11 // pred_check
        %p134 = pneg %p70
      $region14: #{layer_norm.1} parent=11 // pred_check_branch
        %136 = sbr.rel (%p134) target = $region16
      $region15: #{layer_norm.1} parent=11 // pred_region
        _
      $region16: #{layer_norm.1} parent=11 // pred_fallthru
        _
      // Predicated region
      $region17: #{layer_norm.1} parent=11 // pred_check
        %p137 = pneg %p91
      $region18: #{layer_norm.1} parent=11 // pred_check_branch
        %139 = sbr.rel (%p137) target = $region20
      $region19: #{layer_norm.1} parent=11 // pred_region
        _
      $region20: #{layer_norm.1} parent=11 // pred_fallthru
        _
    $region12: #{layer_norm.1} parent=5 // pred_fallthru
      _
    %p140 = scmp.lt.s32.totalorder %s9, 2
    // Predicated region
    $region21: #{layer_norm.1} parent=5 // pred_check
      %p141 = pneg %p140
    $region22: #{layer_norm.1} parent=5 // pred_check_branch
      %143 = sbr.rel (%p141) target = $region24
    $region23: #{layer_norm.1} parent=5 // pred_region
      // Predicated region
      $region25: #{layer_norm.1} parent=23 // pred_check
        %p144 = pneg %p43
      $region26: #{layer_norm.1} parent=23 // pred_check_branch
        %146 = sbr.rel (%p144) target = $region28
      $region27: #{layer_norm.1} parent=23 // pred_region
        %s147 = smul.u32 2, %s17
        %p148 = scmp.lt.s32.totalorder %s16, 1
        %s149 = scalar_select %p148, %s16, 1
        %p150 = scmp.lt.s32.totalorder %s147, 1
        %s151 = scalar_select %p150, %s147, 1
        %s152 = smul.addr %s149, 2
        %s153 = sadd.s32 %s151, %s152
        %s154 = smul.addr %s153, 4
        %s155 = scalar_lea.vmem %s0, %s154
        %s156 = smul.u32 2, %s17
      $region28: #{layer_norm.1} parent=23 // pred_fallthru
        _
    $region24: #{layer_norm.1} parent=5 // pred_fallthru
      _
    %p157 = scmp.le.s32.totalorder 1, %s9
    %p158 = scmp.lt.s32.totalorder %s9, 3
    %p159 = pnand %p157, %p158
    %p160 = pneg %p159
    // Predicated region
    $region29: #{layer_norm.1} parent=5 // pred_check
      _
    $region30: #{layer_norm.1} parent=5 // pred_check_branch
      %162 = sbr.rel (%p159) target = $region32
    $region31: #{layer_norm.1} parent=5 // pred_region
      %s163 = ssub.s32 %s9, 1
      %s164 = smul.u32 2, %s19
      %p165 = scmp.lt.s32.totalorder %s18, 1
      %s166 = scalar_select %p165, %s18, 1
      %p167 = scmp.lt.s32.totalorder %s164, 1
      %s168 = scalar_select %p167, %s164, 1
      %s169 = smul.addr %s166, 2
      %s170 = sadd.s32 %s168, %s169
      %s171 = smul.addr %s170, 4
      %s172 = scalar_lea.vmem %s0, %s171
      %p173 = pneg %p49
      %p174 = pneg %p46
      %p175 = pneg %p70
      %p176 = pneg %p67
      %p177 = pneg %p91
      %p178 = pneg %p88
      %p179 = pneg %p119
      %p180 = pneg %p116
      %s181 = smul.u32 2, %s19
      %p182 = scmp.lt.s32.totalorder %s18, 1
      %s183 = scalar_select %p182, %s18, 1
      %p184 = scmp.lt.s32.totalorder %s181, 1
      %s185 = scalar_select %p184, %s181, 1
      %s186 = smul.addr %s183, 2
      %s187 = sadd.s32 %s185, %s186
      %s188 = smul.addr %s187, 4
      %s189 = scalar_lea.vmem %s3, %s188
      %s190 = smul.u32 2, %s19
      %p191 = scmp.lt.s32.totalorder %s18, 1
      %s192 = scalar_select %p191, %s18, 1
      %p193 = scmp.lt.s32.totalorder %s190, 1
      %s194 = scalar_select %p193, %s190, 1
      %s195 = smul.addr %s192, 2
      %s196 = sadd.s32 %s194, %s195
      %s197 = smul.addr %s196, 4
      %s198 = scalar_lea.vmem %s0, %s197
      %s199 = smul.u32 2, %s19
      %s200 = smul.u32 2, %s19
      %p201 = scmp.lt.s32.totalorder %s18, 1
      %s202 = scalar_select %p201, %s18, 1
      %p203 = scmp.lt.s32.totalorder %s200, 1
      %s204 = scalar_select %p203, %s200, 1
      %s205 = smul.addr %s202, 2
      %s206 = sadd.s32 %s204, %s205
      %s207 = smul.addr %s206, 4
      %s208 = scalar_lea.vmem %s3, %s207
      %s209 = smul.u32 2, %s19
      %v210 = vld [vmem:[%s198] sm:$0xff]
      %212 = vst [vmem:[#allocation1] ss:$2 sm:$0xff] %v210
      %v213 = vld.sshfl [vmem:[#allocation1] sm:$0xff pattern:$0x75316420]
      %v214 = vld.sshfl [vmem:[#allocation1 + $0x8] sm:$0xff pattern:$0x75316420]
      %vm217 = vcmask 1043456
      %v218 = vsel %vm217, %v213, 0.0
      %v219 = vrot.slane %v218, 4
      %v220 = vadd.f32 %v218, %v219
      %v221 = vrot.slane %v220, 2
      %v222 = vadd.f32 %v220, %v221
      %v223 = vrot.slane %v222, 1
      %v224 = vadd.f32 %v222, %v223
      %v225 = vsel %vm217, %v214, 0.0
      %v226 = vrot.slane %v225, 4
      %v227 = vadd.f32 %v225, %v226
      %v228 = vrot.slane %v227, 2
      %v229 = vadd.f32 %v227, %v228
      %v230 = vrot.slane %v229, 1
      %v231 = vadd.f32 %v229, %v230
      %v232 = vrcp.pop 4.0
      %v233 = vmul.f32 4.0, %v232
      %v234 = vsub.f32 1.0, %v233
      %v235 = vmul.f32 %v232, %v234
      %v236 = vadd.f32 %v232, %v235
      %vm237 = vweird.f32 %v232
      %v238 = vsel %vm237, %v232, %v236
      %v239 = vmul.f32 %v224, %v238
      %v240 = vmul.f32 %v231, %v238
      %v243 = vrot.slane %v240, 4
      %v244 = vsel %vm217, %v239, %v243
      %v246 = vsub.f32 %v210, %v244
      %v247 = vmul.f32 %v246, %v246
      %249 = vst [vmem:[#allocation1] ss:$2 sm:$0xff] %v247
      %v250 = vld.sshfl [vmem:[#allocation1] sm:$0xff pattern:$0x75316420]
      %v251 = vld.sshfl [vmem:[#allocation1 + $0x8] sm:$0xff pattern:$0x75316420]
      %v254 = vsel %vm217, %v250, 0.0
      %v255 = vrot.slane %v254, 4
      %v256 = vadd.f32 %v254, %v255
      %v257 = vrot.slane %v256, 2
      %v258 = vadd.f32 %v256, %v257
      %v259 = vrot.slane %v258, 1
      %v260 = vadd.f32 %v258, %v259
      %v261 = vsel %vm217, %v251, 0.0
      %v262 = vrot.slane %v261, 4
      %v263 = vadd.f32 %v261, %v262
      %v264 = vrot.slane %v263, 2
      %v265 = vadd.f32 %v263, %v264
      %v266 = vrot.slane %v265, 1
      %v267 = vadd.f32 %v265, %v266
      %v268 = vmul.f32 %v260, %v238
      %v269 = vmul.f32 %v267, %v238
      %v270 = vadd.f32 %v268, 1e-06
      %v271 = vadd.f32 %v269, 1e-06
      %v272 = vrsqrt.pop %v270
      %v273 = vmul.f32 %v272, %v270
      %v274 = vmul.f32 %v273, %v272
      %v275 = vmul.f32 0.5, %v274
      %v276 = vsub.f32 1.5, %v275
      %v277 = vmul.f32 %v272, %v276
      %vm278 = vweird.f32 %v270
      %vm279 = vweird.f32 %v272
      %vm280 = vmor %vm278, %vm279
      %v281 = vsel %vm280, %v272, %v277
      %v282 = vrsqrt.pop %v271
      %v283 = vmul.f32 %v282, %v271
      %v284 = vmul.f32 %v283, %v282
      %v285 = vmul.f32 0.5, %v284
      %v286 = vsub.f32 1.5, %v285
      %v287 = vmul.f32 %v282, %v286
      %vm288 = vweird.f32 %v271
      %vm289 = vweird.f32 %v282
      %vm290 = vmor %vm288, %vm289
      %v291 = vsel %vm290, %v282, %v287
      %v294 = vrot.slane %v291, 4
      %v295 = vsel %vm217, %v281, %v294
      %v297 = vmul.f32 %v246, %v295
      %v298 = vld [vmem:[%s1] sm:$0xf]
      %300 = vset.pattern.permute.xlu0 0
      %301 = vperm.xlu0 %300, %v298
      %v302 = vpop.permute.xlu0 %301
      %v304 = vunpack.c.l.s4 839922192
      %v305 = vunpack.c.0.s8 %v304
      %v306 = vperm.slane %v302, %v305
      %v308 = vmul.f32 %v297, %v306
      %v309 = vld [vmem:[%s2] sm:$0xf]
      %311 = vset.pattern.permute.xlu0 0
      %312 = vperm.xlu0 %311, %v309
      %v313 = vpop.permute.xlu0 %312
      %v315 = vunpack.c.l.s4 839922192
      %v316 = vunpack.c.0.s8 %v315
      %v317 = vperm.slane %v313, %v316
      %v319 = vadd.f32 %v308, %v317
      %320 = vst [vmem:[%s208] sm:$0xff] %v319
      %s321 = smul.u32 2, %s19
      %p322 = scmp.lt.s32.totalorder %s18, 1
      %s323 = scalar_select %p322, %s18, 1
      %p324 = scmp.lt.s32.totalorder %s321, 1
      %s325 = scalar_select %p324, %s321, 1
      %s326 = smul.addr %s323, 2
      %s327 = sadd.s32 %s325, %s326
      %s328 = smul.addr %s327, 4
      %s329 = scalar_lea.vmem %s3, %s328
      // Predicated region
      $region33: #{layer_norm.1} parent=31 // pred_check
        %p330 = pneg %p116
      $region34: #{layer_norm.1} parent=31 // pred_check_branch
        %332 = sbr.rel (%p330) target = $region36
      $region35: #{layer_norm.1} parent=31 // pred_region
        %s333 = smul.u32 2, %s19
      $region36: #{layer_norm.1} parent=31 // pred_fallthru
        _
    $region32: #{layer_norm.1} parent=5 // pred_fallthru
      _
    %p334 = scmp.le.s32.totalorder 2, %s9
    // Predicated region
    $region37: #{layer_norm.1} parent=5 // pred_check
      %p335 = pneg %p334
    $region38: #{layer_norm.1} parent=5 // pred_check_branch
      %337 = sbr.rel (%p335) target = $region40
    $region39: #{layer_norm.1} parent=5 // pred_region
      %s338 = ssub.s32 %s9, 2
      // Predicated region
      $region41: #{layer_norm.1} parent=39 // pred_check
        %p339 = pneg %p122
      $region42: #{layer_norm.1} parent=39 // pred_check_branch
        %341 = sbr.rel (%p339) target = $region44
      $region43: #{layer_norm.1} parent=39 // pred_region
        %s342 = smul.u32 2, %s21
        %p343 = scmp.lt.s32.totalorder %s20, 1
        %s344 = scalar_select %p343, %s20, 1
        %p345 = scmp.lt.s32.totalorder %s342, 1
        %s346 = scalar_select %p345, %s342, 1
        %s347 = smul.addr %s344, 2
        %s348 = sadd.s32 %s346, %s347
        %s349 = smul.addr %s348, 4
        %s350 = scalar_lea.vmem %s3, %s349
      $region44: #{layer_norm.1} parent=39 // pred_fallthru
        _
    $region40: #{layer_norm.1} parent=5 // pred_fallthru
      _
  $region6: #{layer_norm.1} parent=0 // loop_footer
    %s13 = sadd.s32 1, %s9
  $region7: #{layer_norm.1} parent=0 // loop_footer_branch
    %8 = sbr.rel target = $region3
  $region8: #{layer_norm.1} parent=0 // loop_exit
    _

</llo_original>
